<compile_context>
chip_gen: v6e
topology: v6e:2x2x1
jax: 0.10.0
libtpu: 0.0.40
codegen_flags: <defaults>
</compile_context>

<pallas_src>
import jax
import jax.numpy as jnp
from jax import lax
from jax.experimental import pallas as pl
from jax.experimental.pallas import tpu as pltpu

# ----------------------------------------------------------------------------
# Small synthetic configuration mirroring the real S3Gen flow structure.
# (real: SPK 192, D_ENC 512, C_MEL 80, vocab 6561 — C/D chosen as 128 here for
#  lane-dense layouts; the real 80-channel model would be zero-padded to 128.)
# ----------------------------------------------------------------------------
B            = 2      # batch
SPK_DIM      = 32     # x-vector dim
D_ENC        = 128    # encoder / token-embed dim
C_MEL        = 128    # mel channels (lane dim, 128-multiple)
VOCAB        = 64     # speech-token vocab
T_SPEECH_TOK = 16     # speech token length
T_PROMPT_TOK = 8      # prompt token length
T_MEL        = 16     # target mel frames (token->mel ratio 1 in this toy model)
T_PROMPT_MEL = 8      # prompt mel frames
T_FULL_TOK   = T_PROMPT_TOK + T_SPEECH_TOK
MU_SLICE_START = T_PROMPT_MEL
SIGMA_MIN    = 1e-6   # CFM sigma_min
CFG_RATE     = 0.2    # classifier-free-guidance dropout rate in compute_loss

M_MEL = B * T_MEL          # batch folded into matmul M (mel-frame rows)
M_TOK = B * T_FULL_TOK     # batch folded into matmul M (token rows)


# ----------------------------------------------------------------------------
# Fused single-program kernel: spk-affine (folded) + encoder + encoder_proj +
# CFM masked-MSE.  One MXU-friendly M = B*T for every matmul; weights are
# DMA'd once (single step).
# ----------------------------------------------------------------------------
def _fused_kernel(tok_ref, x1_ref, cond_ref, z_ref,
                  emb_ref, t_ref, cfg_ref, mask_ref,
                  enc_w_ref, enc_b_ref, proj_w_ref, proj_b_ref,
                  est_w_ref, wfold_ref, bfold_ref, est_b_ref, est_wt_ref,
                  out_ref, stack_ref):
    C = C_MEL
    t_row    = t_ref[...]        # (M_MEL, 1) CFM time sample (cosine-scheduled)
    cfg_row  = cfg_ref[...]      # (M_MEL, 1) CFG keep mask (0.0 / 1.0)
    mask_row = mask_ref[...]     # (M_MEL, 1) valid-frame mask (0.0 / 1.0)

    # --- toy encoder (dense+tanh) + encoder_proj, bf16 MXU / f32 acc ---------
    # TODO(synk): real UpsampleConformerEncoder (conv subsampling, conformer
    # blocks, token-length masking) is replaced by a single dense+tanh layer;
    # padded token positions contribute to mu_full (fidelity gap vs. the
    # masked encoder).
    h = jnp.tanh(jnp.dot(tok_ref[...], enc_w_ref[...],
                         preferred_element_type=jnp.float32) + enc_b_ref[...])
    mu_full = (jnp.dot(h.astype(jnp.bfloat16), proj_w_ref[...],
                       preferred_element_type=jnp.float32) + proj_b_ref[...])  # (M_TOK, C)

    # --- CFM y / u construction (f32 VPU, per-row t) --------------------------
    x1 = x1_ref[...]                                                 # (M_MEL, C)
    z  = z_ref[...]
    y = (1.0 - (1.0 - SIGMA_MIN) * t_row) * z + t_row * x1
    u = x1 - (1.0 - SIGMA_MIN) * z

    # --- estimator input: write bf16 casts straight into lane slices of the
    #     (M_MEL, 3C) scratch (no concat copy), then one K=3C MXU matmul ------
    stack_ref[:, 0:C]       = y.astype(jnp.bfloat16)
    stack_ref[:, 2 * C:3 * C] = (cond_ref[...] * cfg_row).astype(jnp.bfloat16)

    # mu slicing aligned to target mel frames, per batch item (static slices;
    # mirrors the PyTorch pad/truncate logic, only the exercised branch traces)
    avail = T_FULL_TOK - MU_SLICE_START
    for b in range(B):
        cfg_b = cfg_row[b * T_MEL:(b + 1) * T_MEL, :]                # (T_MEL, 1)
        if avail <= 0:
            mu_b = jnp.zeros((T_MEL, C_MEL), jnp.float32)
        else:
            take = min(avail, T_MEL)
            lo = b * T_FULL_TOK + MU_SLICE_START
            mu_b = mu_full[lo:lo + take, :]
            if take < T_MEL:
                mu_b = jnp.pad(mu_b, ((0, T_MEL - take), (0, 0)))
        stack_ref[b * T_MEL:(b + 1) * T_MEL, C:2 * C] = (mu_b * cfg_b).astype(jnp.bfloat16)

    # --- speaker path: F.normalize (rsqrt) + affine folded with est_wspk -----
    # TODO(synk): real ConditionalDecoder U-Net estimator is replaced by a
    # pointwise-linear estimator over [y, mu, cond] plus a (spks, t) bias.
    emb = emb_ref[...]                                               # (M_MEL, SPK)
    inv_norm = lax.rsqrt(jnp.maximum(jnp.sum(emb * emb, axis=1, keepdims=True), 1e-24))
    normed = emb * inv_norm
    spk_bias = jnp.dot(normed.astype(jnp.bfloat16), wfold_ref[...],
                       preferred_element_type=jnp.float32)           # (M_MEL, C)
    bias = (spk_bias + bfold_ref[...]) * cfg_row + est_b_ref[...] + est_wt_ref[...] * t_row

    pred = jnp.dot(stack_ref[...], est_w_ref[...],
                   preferred_element_type=jnp.float32) + bias        # (M_MEL, C)

    # --- masked MSE: num = sum((pred-u)^2 * mask), msum = valid frame count ---
    resid = (pred - u) * mask_row
    num  = jnp.sum(resid * resid)
    msum = jnp.sum(mask_row)

    # single lane-dense output row: lane 0 = num, lane 1 = msum
    lane = lax.broadcasted_iota(jnp.int32, (1, C_MEL), 1)
    out_ref[...] = jnp.where(lane == 0, num, 0.0) + jnp.where(lane == 1, msum, 0.0)


def _vmem_full(shape):
    return pl.BlockSpec(shape, lambda i: (0,) * len(shape))


def fused_forward(params, tok_emb, x1, cond, z, emb_row, t_row, cfg_row, mask_row):
    in_specs = [
        _vmem_full((M_TOK, D_ENC)),       # token embeddings (bf16)
        _vmem_full((M_MEL, C_MEL)),       # x1
        _vmem_full((M_MEL, C_MEL)),       # cond
        _vmem_full((M_MEL, C_MEL)),       # z
        _vmem_full((M_MEL, SPK_DIM)),     # embedding repeated per row
        _vmem_full((M_MEL, 1)),           # t per row
        _vmem_full((M_MEL, 1)),           # cfg per row
        _vmem_full((M_MEL, 1)),           # valid-frame mask per row
        _vmem_full((D_ENC, D_ENC)),       # enc_w (bf16)
        _vmem_full((1, D_ENC)),           # enc_b
        _vmem_full((D_ENC, C_MEL)),       # proj_w (bf16)
        _vmem_full((1, C_MEL)),           # proj_b
        _vmem_full((3 * C_MEL, C_MEL)),   # est_w_stack (bf16)
        _vmem_full((SPK_DIM, C_MEL)),     # w_fold = spk_w @ est_wspk (bf16)
        _vmem_full((1, C_MEL)),           # b_fold = spk_b @ est_wspk
        _vmem_full((1, C_MEL)),           # est_b
        _vmem_full((1, C_MEL)),           # est_wt
    ]
    return pl.pallas_call(
        _fused_kernel,
        out_shape=jax.ShapeDtypeStruct((1, C_MEL), jnp.float32),
        grid=(1,),
        in_specs=in_specs,
        out_specs=_vmem_full((1, C_MEL)),
        scratch_shapes=[pltpu.VMEM((M_MEL, 3 * C_MEL), jnp.bfloat16)],
        compiler_params=pltpu.CompilerParams(
            dimension_semantics=("arbitrary",),   # single program; no 2-TC split at toy size
            vmem_limit_bytes=32 * 1024 * 1024,
        ),
    )(tok_emb, x1, cond, z, emb_row, t_row, cfg_row, mask_row,
      params["enc_w"], params["enc_b"], params["proj_w"], params["proj_b"],
      params["est_w_stack"], params["w_fold"], params["b_fold"],
      params["est_b"], params["est_wt"])


# ----------------------------------------------------------------------------
# Full forward (mirrors S3GenFlowForFineTuning.forward)
# ----------------------------------------------------------------------------
def s3gen_flow_forward(params, speech_token, speech_token_len, speech_feat,
                       speech_feat_len, embedding, prompt_token_input,
                       prompt_token_len_input, prompt_feat_input, rng):
    # token concat, clamp, embedding lookup (gather stays in JAX glue)
    # TODO(synk): at real sizes (6561 x 512 table) move this gather in-kernel.
    full_tokens = jnp.concatenate([prompt_token_input, speech_token], axis=1)
    _full_token_lens = prompt_token_len_input + speech_token_len  # TODO(synk): toy encoder ignores lengths
    tokens_clamped = jnp.clip(full_tokens, 0, VOCAB - 1)
    tok_emb = jnp.take(params["embed_table"], tokens_clamped, axis=0).astype(jnp.bfloat16)
    tok_emb_flat = tok_emb.reshape(M_TOK, D_ENC)

    # prompt-mel conditioning: truncate / pad along time to T_target (static)
    t_target = speech_feat.shape[1]
    t_prompt = prompt_feat_input.shape[1]
    if t_prompt > t_target:
        cond = prompt_feat_input[:, :t_target, :]
    else:
        cond = jnp.pad(prompt_feat_input, ((0, 0), (0, t_target - t_prompt), (0, 0)))

    # CFM loss randomness (torch.rand / torch.randn equivalents, seeded)
    k_t, k_z, k_cfg = jax.random.split(rng, 3)
    t_rand = jax.random.uniform(k_t, (B,), jnp.float32)
    t_rand = 1.0 - jnp.cos(t_rand * 0.5 * jnp.pi)                 # cosine t_scheduler
    z = jax.random.normal(k_z, speech_feat.shape, jnp.float32)
    cfg = (jax.random.uniform(k_cfg, (B,)) > CFG_RATE).astype(jnp.float32)

    # per-row vectors (batch folded into M): (B*T_MEL, 1) / (B*T_MEL, SPK)
    frame_idx = jnp.arange(T_MEL, dtype=jnp.int32)[None, :]                  # (1, T)
    valid = (frame_idx < speech_feat_len[:, None]).astype(jnp.float32)       # (B, T)
    mask_row = valid.reshape(M_MEL, 1)
    t_row = jnp.repeat(t_rand[:, None], T_MEL, axis=1).reshape(M_MEL, 1)
    cfg_row = jnp.repeat(cfg[:, None], T_MEL, axis=1).reshape(M_MEL, 1)
    emb_row = jnp.repeat(embedding[:, None, :], T_MEL, axis=1).reshape(M_MEL, SPK_DIM)

    x1_flat = speech_feat.reshape(M_MEL, C_MEL)
    cond_flat = cond.reshape(M_MEL, C_MEL)
    z_flat = z.reshape(M_MEL, C_MEL)

    out = fused_forward(params, tok_emb_flat, x1_flat, cond_flat, z_flat,
                        emb_row, t_row, cfg_row, mask_row)
    num, msum = out[0, 0], out[0, 1]
    loss = num / (msum * jnp.float32(C_MEL))
    return loss, loss, jnp.float32(0.0)


# ----------------------------------------------------------------------------
# Deterministic synthetic parameters (shapes implied by the module's __init__)
# ----------------------------------------------------------------------------
def init_params(key):
    ks = jax.random.split(key, 10)
    s = 0.05
    f32, bf16 = jnp.float32, jnp.bfloat16
    return {
        "spk_w": jax.random.normal(ks[0], (SPK_DIM, C_MEL), f32) * s,
        "spk_b": jax.random.normal(ks[1], (1, C_MEL), f32) * s,
        "embed_table": jax.random.normal(ks[2], (VOCAB, D_ENC), f32) * s,
        # MXU weights prepacked as bf16 (f32 accumulation inside the kernel)
        "enc_w": (jax.random.normal(ks[3], (D_ENC, D_ENC), f32) * s).astype(bf16),
        "enc_b": jax.random.normal(ks[4], (1, D_ENC), f32) * s,
        "proj_w": (jax.random.normal(ks[5], (D_ENC, C_MEL), f32) * s).astype(bf16),
        "proj_b": jax.random.normal(ks[6], (1, C_MEL), f32) * s,
        # stacked [Wy; Wmu; Wcond] -> single K = 3*C estimator matmul
        "est_w_stack": (jax.random.normal(ks[7], (3 * C_MEL, C_MEL), f32) * s).astype(bf16),
        "est_wspk": jax.random.normal(ks[8], (C_MEL, C_MEL), f32) * s,
        "est_b": jnp.zeros((1, C_MEL), f32),
        "est_wt": jax.random.normal(ks[9], (1, C_MEL), f32) * s,
    }


def fold_params(raw):
    """Fold est_wspk into the speaker affine (exact: CFG scaling applies after)."""
    w_fold = (raw["spk_w"] @ raw["est_wspk"]).astype(jnp.bfloat16)   # (SPK, C)
    b_fold = raw["spk_b"] @ raw["est_wspk"]                          # (1, C) f32
    return {
        "embed_table": raw["embed_table"],
        "enc_w": raw["enc_w"], "enc_b": raw["enc_b"],
        "proj_w": raw["proj_w"], "proj_b": raw["proj_b"],
        "est_w_stack": raw["est_w_stack"],
        "w_fold": w_fold, "b_fold": b_fold,
        "est_b": raw["est_b"], "est_wt": raw["est_wt"],
    }


if __name__ == "__main__":
    assert T_FULL_TOK - MU_SLICE_START >= T_MEL  # toy config: exact mu-slice fit

    params = fold_params(init_params(jax.random.PRNGKey(42)))

    key = jax.random.PRNGKey(0)
    k1, k2, k3, k4, k5, krng = jax.random.split(key, 6)
    speech_token = jax.random.randint(k1, (B, T_SPEECH_TOK), 0, VOCAB, jnp.int32)
    speech_token_len = jnp.array([T_SPEECH_TOK, T_SPEECH_TOK - 4], jnp.int32)
    speech_feat = jax.random.normal(k2, (B, T_MEL, C_MEL), jnp.float32)
    speech_feat_len = jnp.array([T_MEL, T_MEL - 4], jnp.int32)
    embedding = jax.random.normal(k3, (B, SPK_DIM), jnp.float32)
    prompt_token_input = jax.random.randint(k4, (B, T_PROMPT_TOK), 0, VOCAB, jnp.int32)
    prompt_token_len_input = jnp.array([T_PROMPT_TOK, T_PROMPT_TOK], jnp.int32)
    prompt_feat_input = jax.random.normal(k5, (B, T_PROMPT_MEL, C_MEL), jnp.float32)

    fwd = jax.jit(s3gen_flow_forward)
    loss, loss_again, aux = fwd(
        params, speech_token, speech_token_len, speech_feat, speech_feat_len,
        embedding, prompt_token_input, prompt_token_len_input, prompt_feat_input,
        krng)
    jax.block_until_ready(loss)
    assert bool(jnp.isfinite(loss))
    print("KERNEL_OK")
</pallas_src>

<mosaic_0001>
module attributes {stable_mosaic.version = 11 : i64} {
  func.func @_fused_kernel(%arg0: i32, %arg1: memref<48x128xbf16, #tpu.memory_space<vmem>>, %arg2: memref<32x128xf32, #tpu.memory_space<vmem>>, %arg3: memref<32x128xf32, #tpu.memory_space<vmem>>, %arg4: memref<32x128xf32, #tpu.memory_space<vmem>>, %arg5: memref<32x32xf32, #tpu.memory_space<vmem>>, %arg6: memref<32x1xf32, #tpu.memory_space<vmem>>, %arg7: memref<32x1xf32, #tpu.memory_space<vmem>>, %arg8: memref<32x1xf32, #tpu.memory_space<vmem>>, %arg9: memref<128x128xbf16, #tpu.memory_space<vmem>>, %arg10: memref<1x128xf32, #tpu.memory_space<vmem>>, %arg11: memref<128x128xbf16, #tpu.memory_space<vmem>>, %arg12: memref<1x128xf32, #tpu.memory_space<vmem>>, %arg13: memref<384x128xbf16, #tpu.memory_space<vmem>>, %arg14: memref<32x128xbf16, #tpu.memory_space<vmem>>, %arg15: memref<1x128xf32, #tpu.memory_space<vmem>>, %arg16: memref<1x128xf32, #tpu.memory_space<vmem>>, %arg17: memref<1x128xf32, #tpu.memory_space<vmem>>, %arg18: memref<1x128xf32, #tpu.memory_space<vmem>>, %arg19: memref<32x384xbf16, #tpu.memory_space<vmem>>) attributes {dimension_semantics = [#tpu.dimension_semantics<arbitrary>], iteration_bounds = array<i64: 1>, scalar_prefetch = 0 : i64, scratch_operands = 1 : i64, tpu.core_type = #tpu.core_type<tc>, window_params = [{pipeline_mode = #tpu.pipeline_mode<synchronous>, transform_indices = @transform_0, window_bounds = array<i64: 48, 128>}, {pipeline_mode = #tpu.pipeline_mode<synchronous>, transform_indices = @transform_1, window_bounds = array<i64: 32, 128>}, {pipeline_mode = #tpu.pipeline_mode<synchronous>, transform_indices = @transform_2, window_bounds = array<i64: 32, 128>}, {pipeline_mode = #tpu.pipeline_mode<synchronous>, transform_indices = @transform_3, window_bounds = array<i64: 32, 128>}, {pipeline_mode = #tpu.pipeline_mode<synchronous>, transform_indices = @transform_4, window_bounds = array<i64: 32, 32>}, {pipeline_mode = #tpu.pipeline_mode<synchronous>, transform_indices = @transform_5, window_bounds = array<i64: 32, 1>}, {pipeline_mode = #tpu.pipeline_mode<synchronous>, transform_indices = @transform_6, window_bounds = array<i64: 32, 1>}, {pipeline_mode = #tpu.pipeline_mode<synchronous>, transform_indices = @transform_7, window_bounds = array<i64: 32, 1>}, {pipeline_mode = #tpu.pipeline_mode<synchronous>, transform_indices = @transform_8, window_bounds = array<i64: 128, 128>}, {pipeline_mode = #tpu.pipeline_mode<synchronous>, transform_indices = @transform_9, window_bounds = array<i64: 1, 128>}, {pipeline_mode = #tpu.pipeline_mode<synchronous>, transform_indices = @transform_10, window_bounds = array<i64: 128, 128>}, {pipeline_mode = #tpu.pipeline_mode<synchronous>, transform_indices = @transform_11, window_bounds = array<i64: 1, 128>}, {pipeline_mode = #tpu.pipeline_mode<synchronous>, transform_indices = @transform_12, window_bounds = array<i64: 384, 128>}, {pipeline_mode = #tpu.pipeline_mode<synchronous>, transform_indices = @transform_13, window_bounds = array<i64: 32, 128>}, {pipeline_mode = #tpu.pipeline_mode<synchronous>, transform_indices = @transform_14, window_bounds = array<i64: 1, 128>}, {pipeline_mode = #tpu.pipeline_mode<synchronous>, transform_indices = @transform_15, window_bounds = array<i64: 1, 128>}, {pipeline_mode = #tpu.pipeline_mode<synchronous>, transform_indices = @transform_16, window_bounds = array<i64: 1, 128>}, {pipeline_mode = #tpu.pipeline_mode<synchronous>, transform_indices = @transform_17, window_bounds = array<i64: 1, 128>}]} {
    %c0 = arith.constant 0 : index
    %c0_0 = arith.constant 0 : index
    %0 = vector.load %arg6[%c0, %c0_0] : memref<32x1xf32, #tpu.memory_space<vmem>>, vector<32x1xf32>
    %c0_1 = arith.constant 0 : index
    %c0_2 = arith.constant 0 : index
    %1 = vector.load %arg7[%c0_1, %c0_2] : memref<32x1xf32, #tpu.memory_space<vmem>>, vector<32x1xf32>
    %c0_3 = arith.constant 0 : index
    %c0_4 = arith.constant 0 : index
    %2 = vector.load %arg8[%c0_3, %c0_4] : memref<32x1xf32, #tpu.memory_space<vmem>>, vector<32x1xf32>
    %c0_5 = arith.constant 0 : index
    %c0_6 = arith.constant 0 : index
    %3 = vector.load %arg1[%c0_5, %c0_6] : memref<48x128xbf16, #tpu.memory_space<vmem>>, vector<48x128xbf16>
    %c0_7 = arith.constant 0 : index
    %c0_8 = arith.constant 0 : index
    %4 = vector.load %arg9[%c0_7, %c0_8] : memref<128x128xbf16, #tpu.memory_space<vmem>>, vector<128x128xbf16>
    %cst = arith.constant dense<0.000000e+00> : vector<48x128xf32>
    %5 = tpu.matmul %3, %4, %cst {dimension_numbers = #tpu.dot_dimension_numbers<[1], [0], [0], [1], [0, 0, 1, 1], [], []>} : vector<48x128xbf16>, vector<128x128xbf16>, vector<48x128xf32> -> vector<48x128xf32>
    %c0_9 = arith.constant 0 : index
    %c0_10 = arith.constant 0 : index
    %6 = vector.load %arg10[%c0_9, %c0_10] : memref<1x128xf32, #tpu.memory_space<vmem>>, vector<1x128xf32>
    %7 = vector.broadcast %6 : vector<1x128xf32> to vector<48x128xf32>
    %8 = arith.addf %5, %7 : vector<48x128xf32>
    %9 = math.tanh %8 : vector<48x128xf32>
    %10 = arith.truncf %9 : vector<48x128xf32> to vector<48x128xbf16>
    %c0_11 = arith.constant 0 : index
    %c0_12 = arith.constant 0 : index
    %11 = vector.load %arg11[%c0_11, %c0_12] : memref<128x128xbf16, #tpu.memory_space<vmem>>, vector<128x128xbf16>
    %cst_13 = arith.constant dense<0.000000e+00> : vector<48x128xf32>
    %12 = tpu.matmul %10, %11, %cst_13 {dimension_numbers = #tpu.dot_dimension_numbers<[1], [0], [0], [1], [0, 0, 1, 1], [], []>} : vector<48x128xbf16>, vector<128x128xbf16>, vector<48x128xf32> -> vector<48x128xf32>
    %c0_14 = arith.constant 0 : index
    %c0_15 = arith.constant 0 : index
    %13 = vector.load %arg12[%c0_14, %c0_15] : memref<1x128xf32, #tpu.memory_space<vmem>>, vector<1x128xf32>
    %14 = vector.broadcast %13 : vector<1x128xf32> to vector<48x128xf32>
    %15 = arith.addf %12, %14 : vector<48x128xf32>
    %c0_16 = arith.constant 0 : index
    %c0_17 = arith.constant 0 : index
    %16 = vector.load %arg2[%c0_16, %c0_17] : memref<32x128xf32, #tpu.memory_space<vmem>>, vector<32x128xf32>
    %c0_18 = arith.constant 0 : index
    %c0_19 = arith.constant 0 : index
    %17 = vector.load %arg4[%c0_18, %c0_19] : memref<32x128xf32, #tpu.memory_space<vmem>>, vector<32x128xf32>
    %cst_20 = arith.constant 0.999998986 : f32
    %18 = vector.broadcast %cst_20 : f32 to vector<32x1xf32>
    %19 = arith.mulf %18, %0 : vector<32x1xf32>
    %cst_21 = arith.constant 1.000000e+00 : f32
    %20 = vector.broadcast %cst_21 : f32 to vector<32x1xf32>
    %21 = arith.subf %20, %19 : vector<32x1xf32>
    %22 = vector.broadcast %21 : vector<32x1xf32> to vector<32x128xf32>
    %23 = arith.mulf %22, %17 : vector<32x128xf32>
    %24 = vector.broadcast %0 : vector<32x1xf32> to vector<32x128xf32>
    %25 = arith.mulf %24, %16 : vector<32x128xf32>
    %26 = arith.addf %23, %25 : vector<32x128xf32>
    %cst_22 = arith.constant 0.999998986 : f32
    %27 = vector.broadcast %cst_22 : f32 to vector<32x128xf32>
    %28 = arith.mulf %27, %17 : vector<32x128xf32>
    %29 = arith.subf %16, %28 : vector<32x128xf32>
    %30 = arith.truncf %26 : vector<32x128xf32> to vector<32x128xbf16>
    %c0_23 = arith.constant 0 : index
    %c0_24 = arith.constant 0 : index
    %31 = vector.load %arg19[%c0_23, %c0_24] : memref<32x384xbf16, #tpu.memory_space<vmem>>, vector<32x128xbf16>
    tpu.vector_store %arg19[%c0_23, %c0_24], %30 {strides = array<i32>} : memref<32x384xbf16, #tpu.memory_space<vmem>>, vector<32x128xbf16>,
    %c0_25 = arith.constant 0 : index
    %c0_26 = arith.constant 0 : index
    %32 = vector.load %arg3[%c0_25, %c0_26] : memref<32x128xf32, #tpu.memory_space<vmem>>, vector<32x128xf32>
    %33 = vector.broadcast %1 : vector<32x1xf32> to vector<32x128xf32>
    %34 = arith.mulf %32, %33 : vector<32x128xf32>
    %35 = arith.truncf %34 : vector<32x128xf32> to vector<32x128xbf16>
    %c0_27 = arith.constant 0 : index
    %c256 = arith.constant 256 : index
    %36 = vector.load %arg19[%c0_27, %c256] : memref<32x384xbf16, #tpu.memory_space<vmem>>, vector<32x128xbf16>
    tpu.vector_store %arg19[%c0_27, %c256], %35 {strides = array<i32>} : memref<32x384xbf16, #tpu.memory_space<vmem>>, vector<32x128xbf16>,
    %37 = vector.extract_strided_slice %1 {offsets = [0, 0], sizes = [16, 1], strides = [1, 1]} : vector<32x1xf32> to vector<16x1xf32>
    %38 = vector.extract_strided_slice %15 {offsets = [8, 0], sizes = [16, 128], strides = [1, 1]} : vector<48x128xf32> to vector<16x128xf32>
    %39 = vector.broadcast %37 : vector<16x1xf32> to vector<16x128xf32>
    %40 = arith.mulf %38, %39 : vector<16x128xf32>
    %41 = arith.truncf %40 : vector<16x128xf32> to vector<16x128xbf16>
    %c0_28 = arith.constant 0 : index
    %c128 = arith.constant 128 : index
    %42 = vector.load %arg19[%c0_28, %c128] : memref<32x384xbf16, #tpu.memory_space<vmem>>, vector<16x128xbf16>
    tpu.vector_store %arg19[%c0_28, %c128], %41 {strides = array<i32>} : memref<32x384xbf16, #tpu.memory_space<vmem>>, vector<16x128xbf16>,
    %43 = vector.extract_strided_slice %1 {offsets = [16, 0], sizes = [16, 1], strides = [1, 1]} : vector<32x1xf32> to vector<16x1xf32>
    %44 = vector.extract_strided_slice %15 {offsets = [32, 0], sizes = [16, 128], strides = [1, 1]} : vector<48x128xf32> to vector<16x128xf32>
    %45 = vector.broadcast %43 : vector<16x1xf32> to vector<16x128xf32>
    %46 = arith.mulf %44, %45 : vector<16x128xf32>
    %47 = arith.truncf %46 : vector<16x128xf32> to vector<16x128xbf16>
    %c16 = arith.constant 16 : index
    %c128_29 = arith.constant 128 : index
    %48 = vector.load %arg19[%c16, %c128_29] : memref<32x384xbf16, #tpu.memory_space<vmem>>, vector<16x128xbf16>
    tpu.vector_store %arg19[%c16, %c128_29], %47 {strides = array<i32>} : memref<32x384xbf16, #tpu.memory_space<vmem>>, vector<16x128xbf16>,
    %c0_30 = arith.constant 0 : index
    %c0_31 = arith.constant 0 : index
    %49 = vector.load %arg5[%c0_30, %c0_31] : memref<32x32xf32, #tpu.memory_space<vmem>>, vector<32x32xf32>
    %50 = arith.mulf %49, %49 : vector<32x32xf32>
    %cst_32 = arith.constant dense<0.000000e+00> : vector<32xf32>
    %51 = vector.multi_reduction <add>, %50, %cst_32 [1] : vector<32x32xf32> to vector<32xf32>
    %52 = vector.shape_cast %51 : vector<32xf32> to vector<32x1xf32>
    %cst_33 = arith.constant 1.000000e-24 : f32
    %53 = vector.broadcast %cst_33 : f32 to vector<32x1xf32>
    %54 = arith.maximumf %52, %53 : vector<32x1xf32>
    %55 = math.rsqrt %54 : vector<32x1xf32>
    %56 = vector.broadcast %55 : vector<32x1xf32> to vector<32x32xf32>
    %57 = arith.mulf %49, %56 : vector<32x32xf32>
    %58 = arith.truncf %57 : vector<32x32xf32> to vector<32x32xbf16>
    %c0_34 = arith.constant 0 : index
    %c0_35 = arith.constant 0 : index
    %59 = vector.load %arg14[%c0_34, %c0_35] : memref<32x128xbf16, #tpu.memory_space<vmem>>, vector<32x128xbf16>
    %cst_36 = arith.constant dense<0.000000e+00> : vector<32x128xf32>
    %60 = tpu.matmul %58, %59, %cst_36 {dimension_numbers = #tpu.dot_dimension_numbers<[1], [0], [0], [1], [0, 0, 1, 1], [], []>} : vector<32x32xbf16>, vector<32x128xbf16>, vector<32x128xf32> -> vector<32x128xf32>
    %c0_37 = arith.constant 0 : index
    %c0_38 = arith.constant 0 : index
    %61 = vector.load %arg15[%c0_37, %c0_38] : memref<1x128xf32, #tpu.memory_space<vmem>>, vector<1x128xf32>
    %62 = vector.broadcast %61 : vector<1x128xf32> to vector<32x128xf32>
    %63 = arith.addf %60, %62 : vector<32x128xf32>
    %64 = vector.broadcast %1 : vector<32x1xf32> to vector<32x128xf32>
    %65 = arith.mulf %63, %64 : vector<32x128xf32>
    %c0_39 = arith.constant 0 : index
    %c0_40 = arith.constant 0 : index
    %66 = vector.load %arg16[%c0_39, %c0_40] : memref<1x128xf32, #tpu.memory_space<vmem>>, vector<1x128xf32>
    %67 = vector.broadcast %66 : vector<1x128xf32> to vector<32x128xf32>
    %68 = arith.addf %65, %67 : vector<32x128xf32>
    %c0_41 = arith.constant 0 : index
    %c0_42 = arith.constant 0 : index
    %69 = vector.load %arg17[%c0_41, %c0_42] : memref<1x128xf32, #tpu.memory_space<vmem>>, vector<1x128xf32>
    %70 = vector.broadcast %69 : vector<1x128xf32> to vector<32x128xf32>
    %71 = vector.broadcast %0 : vector<32x1xf32> to vector<32x128xf32>
    %72 = arith.mulf %70, %71 : vector<32x128xf32>
    %73 = arith.addf %68, %72 : vector<32x128xf32>
    %c0_43 = arith.constant 0 : index
    %c0_44 = arith.constant 0 : index
    %74 = vector.load %arg19[%c0_43, %c0_44] : memref<32x384xbf16, #tpu.memory_space<vmem>>, vector<32x384xbf16>
    %c0_45 = arith.constant 0 : index
    %c0_46 = arith.constant 0 : index
    %75 = vector.load %arg13[%c0_45, %c0_46] : memref<384x128xbf16, #tpu.memory_space<vmem>>, vector<384x128xbf16>
    %cst_47 = arith.constant dense<0.000000e+00> : vector<32x128xf32>
    %76 = tpu.matmul %74, %75, %cst_47 {dimension_numbers = #tpu.dot_dimension_numbers<[1], [0], [0], [1], [0, 0, 1, 1], [], []>} : vector<32x384xbf16>, vector<384x128xbf16>, vector<32x128xf32> -> vector<32x128xf32>
    %77 = arith.addf %76, %73 : vector<32x128xf32>
    %78 = arith.subf %77, %29 : vector<32x128xf32>
    %79 = vector.broadcast %2 : vector<32x1xf32> to vector<32x128xf32>
    %80 = arith.mulf %78, %79 : vector<32x128xf32>
    %81 = arith.mulf %80, %80 : vector<32x128xf32>
    %82 = vector.shape_cast %81 : vector<32x128xf32> to vector<1x32x128xf32>
    %cst_48 = arith.constant dense<0.000000e+00> : vector<1xf32>
    %83 = vector.multi_reduction <add>, %82, %cst_48 [1, 2] : vector<1x32x128xf32> to vector<1xf32>
    %84 = vector.shape_cast %83 : vector<1xf32> to vector<1x1x1xf32>
    %85 = vector.extract %84[0, 0, 0] : f32 from vector<1x1x1xf32>
    %86 = vector.shape_cast %2 : vector<32x1xf32> to vector<1x32x1xf32>
    %cst_49 = arith.constant dense<0.000000e+00> : vector<1xf32>
    %87 = vector.multi_reduction <add>, %86, %cst_49 [1, 2] : vector<1x32x1xf32> to vector<1xf32>
    %88 = vector.shape_cast %87 : vector<1xf32> to vector<1x1x1xf32>
    %89 = vector.extract %88[0, 0, 0] : f32 from vector<1x1x1xf32>
    %90 = tpu.iota {dimensions = array<i32: 1>} : vector<1x128xi32>
    %c0_i32 = arith.constant 0 : i32
    %91 = vector.broadcast %c0_i32 : i32 to vector<1x128xi32>
    %92 = arith.cmpi eq, %90, %91 : vector<1x128xi32>
    %cst_50 = arith.constant 0.000000e+00 : f32
    %93 = vector.broadcast %85 : f32 to vector<1x128xf32>
    %94 = vector.broadcast %cst_50 : f32 to vector<1x128xf32>
    %95 = arith.select %92, %93, %94 : vector<1x128xi1>, vector<1x128xf32>
    %c1_i32 = arith.constant 1 : i32
    %96 = vector.broadcast %c1_i32 : i32 to vector<1x128xi32>
    %97 = arith.cmpi eq, %90, %96 : vector<1x128xi32>
    %cst_51 = arith.constant 0.000000e+00 : f32
    %98 = vector.broadcast %89 : f32 to vector<1x128xf32>
    %99 = vector.broadcast %cst_51 : f32 to vector<1x128xf32>
    %100 = arith.select %97, %98, %99 : vector<1x128xi1>, vector<1x128xf32>
    %101 = arith.addf %95, %100 : vector<1x128xf32>
    %c0_52 = arith.constant 0 : index
    %c0_53 = arith.constant 0 : index
    %102 = vector.load %arg18[%c0_52, %c0_53] : memref<1x128xf32, #tpu.memory_space<vmem>>, vector<1x128xf32>
    tpu.vector_store %arg18[%c0_52, %c0_53], %101 {strides = array<i32>} : memref<1x128xf32, #tpu.memory_space<vmem>>, vector<1x128xf32>,
    return
  }
  func.func @transform_0(%arg0: i32) -> (i32, i32) {
    %c0_i32 = arith.constant 0 : i32
    %c0_i32_0 = arith.constant 0 : i32
    %c0_i32_1 = arith.constant 0 : i32
    return %c0_i32, %c0_i32_0 : i32, i32
  }
  func.func @transform_1(%arg0: i32) -> (i32, i32) {
    %c0_i32 = arith.constant 0 : i32
    %c0_i32_0 = arith.constant 0 : i32
    %c0_i32_1 = arith.constant 0 : i32
    return %c0_i32, %c0_i32_0 : i32, i32
  }
  func.func @transform_2(%arg0: i32) -> (i32, i32) {
    %c0_i32 = arith.constant 0 : i32
    %c0_i32_0 = arith.constant 0 : i32
    %c0_i32_1 = arith.constant 0 : i32
    return %c0_i32, %c0_i32_0 : i32, i32
  }
  func.func @transform_3(%arg0: i32) -> (i32, i32) {
    %c0_i32 = arith.constant 0 : i32
    %c0_i32_0 = arith.constant 0 : i32
    %c0_i32_1 = arith.constant 0 : i32
    return %c0_i32, %c0_i32_0 : i32, i32
  }
  func.func @transform_4(%arg0: i32) -> (i32, i32) {
    %c0_i32 = arith.constant 0 : i32
    %c0_i32_0 = arith.constant 0 : i32
    %c0_i32_1 = arith.constant 0 : i32
    return %c0_i32, %c0_i32_0 : i32, i32
  }
  func.func @transform_5(%arg0: i32) -> (i32, i32) {
    %c0_i32 = arith.constant 0 : i32
    %c0_i32_0 = arith.constant 0 : i32
    %c0_i32_1 = arith.constant 0 : i32
    return %c0_i32, %c0_i32_0 : i32, i32
  }
  func.func @transform_6(%arg0: i32) -> (i32, i32) {
    %c0_i32 = arith.constant 0 : i32
    %c0_i32_0 = arith.constant 0 : i32
    %c0_i32_1 = arith.constant 0 : i32
    return %c0_i32, %c0_i32_0 : i32, i32
  }
  func.func @transform_7(%arg0: i32) -> (i32, i32) {
    %c0_i32 = arith.constant 0 : i32
    %c0_i32_0 = arith.constant 0 : i32
    %c0_i32_1 = arith.constant 0 : i32
    return %c0_i32, %c0_i32_0 : i32, i32
  }
  func.func @transform_8(%arg0: i32) -> (i32, i32) {
    %c0_i32 = arith.constant 0 : i32
    %c0_i32_0 = arith.constant 0 : i32
    %c0_i32_1 = arith.constant 0 : i32
    return %c0_i32, %c0_i32_0 : i32, i32
  }
  func.func @transform_9(%arg0: i32) -> (i32, i32) {
    %c0_i32 = arith.constant 0 : i32
    %c0_i32_0 = arith.constant 0 : i32
    %c0_i32_1 = arith.constant 0 : i32
    return %c0_i32, %c0_i32_0 : i32, i32
  }
  func.func @transform_10(%arg0: i32) -> (i32, i32) {
    %c0_i32 = arith.constant 0 : i32
    %c0_i32_0 = arith.constant 0 : i32
    %c0_i32_1 = arith.constant 0 : i32
    return %c0_i32, %c0_i32_0 : i32, i32
  }
  func.func @transform_11(%arg0: i32) -> (i32, i32) {
    %c0_i32 = arith.constant 0 : i32
    %c0_i32_0 = arith.constant 0 : i32
    %c0_i32_1 = arith.constant 0 : i32
    return %c0_i32, %c0_i32_0 : i32, i32
  }
  func.func @transform_12(%arg0: i32) -> (i32, i32) {
    %c0_i32 = arith.constant 0 : i32
    %c0_i32_0 = arith.constant 0 : i32
    %c0_i32_1 = arith.constant 0 : i32
    return %c0_i32, %c0_i32_0 : i32, i32
  }
  func.func @transform_13(%arg0: i32) -> (i32, i32) {
    %c0_i32 = arith.constant 0 : i32
    %c0_i32_0 = arith.constant 0 : i32
    %c0_i32_1 = arith.constant 0 : i32
    return %c0_i32, %c0_i32_0 : i32, i32
  }
  func.func @transform_14(%arg0: i32) -> (i32, i32) {
    %c0_i32 = arith.constant 0 : i32
    %c0_i32_0 = arith.constant 0 : i32
    %c0_i32_1 = arith.constant 0 : i32
    return %c0_i32, %c0_i32_0 : i32, i32
  }
  func.func @transform_15(%arg0: i32) -> (i32, i32) {
    %c0_i32 = arith.constant 0 : i32
    %c0_i32_0 = arith.constant 0 : i32
    %c0_i32_1 = arith.constant 0 : i32
    return %c0_i32, %c0_i32_0 : i32, i32
  }
  func.func @transform_16(%arg0: i32) -> (i32, i32) {
    %c0_i32 = arith.constant 0 : i32
    %c0_i32_0 = arith.constant 0 : i32
    %c0_i32_1 = arith.constant 0 : i32
    return %c0_i32, %c0_i32_0 : i32, i32
  }
  func.func @transform_17(%arg0: i32) -> (i32, i32) {
    %c0_i32 = arith.constant 0 : i32
    %c0_i32_0 = arith.constant 0 : i32
    %c0_i32_1 = arith.constant 0 : i32
    return %c0_i32, %c0_i32_0 : i32, i32
  }
}

</mosaic_0001>

<llo_original>
// kernel: s3gen_flow_forward.3
$region0: #{s3gen_flow_forward.3}
  #allocation0 [shape = 'u32[]', space=smem, size = 0x4, offset = 0x4, fixed_abs, tag = 'smem constant byte address 0x4 - core index']
  #allocation1 [shape = 'u32[144,128]{1,0:T(1,128)}', space=vmem, size = 0x12000, scoped, tag = 'internal scratch']
  #allocation2 [shape = 'bf16[32,384]{1,0:T(8,128)(2,1)}', space=vmem, size = 0x6000, scoped, tag = 'scratch operand']
  %s0 = inlined_call_operand.vmem [shape: bf16[48,128], index: 0, kind: input, shape index: {}]
  %s1 = inlined_call_operand.vmem [shape: f32[32,128], index: 1, kind: input, shape index: {}]
  %s2 = inlined_call_operand.vmem [shape: f32[32,128], index: 2, kind: input, shape index: {}]
  %s3 = inlined_call_operand.vmem [shape: f32[32,128], index: 3, kind: input, shape index: {}]
  %s4 = inlined_call_operand.vmem [shape: f32[32,32], index: 4, kind: input, shape index: {}]
  %s5 = inlined_call_operand.vmem [shape: f32[32,1], index: 5, kind: input, shape index: {}]
  %s6 = inlined_call_operand.vmem [shape: f32[32,1], index: 6, kind: input, shape index: {}]
  %s7 = inlined_call_operand.vmem [shape: f32[32,1], index: 7, kind: input, shape index: {}]
  %s8 = inlined_call_operand.vmem [shape: bf16[128,128], index: 8, kind: input, shape index: {}]
  %s9 = inlined_call_operand.vmem [shape: f32[1,128], index: 9, kind: input, shape index: {}]
  %s10 = inlined_call_operand.vmem [shape: bf16[128,128], index: 10, kind: input, shape index: {}]
  %s11 = inlined_call_operand.vmem [shape: f32[1,128], index: 11, kind: input, shape index: {}]
  %s12 = inlined_call_operand.vmem [shape: bf16[384,128], index: 12, kind: input, shape index: {}]
  %s13 = inlined_call_operand.vmem [shape: bf16[32,128], index: 13, kind: input, shape index: {}]
  %s14 = inlined_call_operand.vmem [shape: f32[1,128], index: 14, kind: input, shape index: {}]
  %s15 = inlined_call_operand.vmem [shape: f32[1,128], index: 15, kind: input, shape index: {}]
  %s16 = inlined_call_operand.vmem [shape: f32[1,128], index: 16, kind: input, shape index: {}]
  %s17 = inlined_call_operand.vmem [shape: f32[1,128], index: 17, kind: output, shape index: {}]
  %s18 = sld [smem:[#allocation0]]
  $region78: #{s3gen_flow_forward.3} parent=0
    _
  %s20 = ssub.s32 1, %s18
  %s21 = scalar_select 0, %s20, %s18
  // Predicated region
  $region2: #{s3gen_flow_forward.3} parent=0 // pred_check
    _
  $region3: #{s3gen_flow_forward.3} parent=0 // pred_check_branch
    %23 = sbr.rel (0) target = $region5
  $region4: #{s3gen_flow_forward.3} parent=0 // pred_region
    _
  $region5: #{s3gen_flow_forward.3} parent=0 // pred_fallthru
    _
  // Predicated region
  $region6: #{s3gen_flow_forward.3} parent=0 // pred_check
    _
  $region7: #{s3gen_flow_forward.3} parent=0 // pred_check_branch
    %25 = sbr.rel (0) target = $region9
  $region8: #{s3gen_flow_forward.3} parent=0 // pred_region
    _
  $region9: #{s3gen_flow_forward.3} parent=0 // pred_fallthru
    _
  // Predicated region
  $region10: #{s3gen_flow_forward.3} parent=0 // pred_check
    _
  $region11: #{s3gen_flow_forward.3} parent=0 // pred_check_branch
    %27 = sbr.rel (0) target = $region13
  $region12: #{s3gen_flow_forward.3} parent=0 // pred_region
    _
  $region13: #{s3gen_flow_forward.3} parent=0 // pred_fallthru
    _
  // Predicated region
  $region14: #{s3gen_flow_forward.3} parent=0 // pred_check
    _
  $region15: #{s3gen_flow_forward.3} parent=0 // pred_check_branch
    %29 = sbr.rel (0) target = $region17
  $region16: #{s3gen_flow_forward.3} parent=0 // pred_region
    _
  $region17: #{s3gen_flow_forward.3} parent=0 // pred_fallthru
    _
  // Predicated region
  $region18: #{s3gen_flow_forward.3} parent=0 // pred_check
    _
  $region19: #{s3gen_flow_forward.3} parent=0 // pred_check_branch
    %31 = sbr.rel (0) target = $region21
  $region20: #{s3gen_flow_forward.3} parent=0 // pred_region
    _
  $region21: #{s3gen_flow_forward.3} parent=0 // pred_fallthru
    _
  // Predicated region
  $region22: #{s3gen_flow_forward.3} parent=0 // pred_check
    _
  $region23: #{s3gen_flow_forward.3} parent=0 // pred_check_branch
    %33 = sbr.rel (0) target = $region25
  $region24: #{s3gen_flow_forward.3} parent=0 // pred_region
    _
  $region25: #{s3gen_flow_forward.3} parent=0 // pred_fallthru
    _
  // Predicated region
  $region26: #{s3gen_flow_forward.3} parent=0 // pred_check
    _
  $region27: #{s3gen_flow_forward.3} parent=0 // pred_check_branch
    %35 = sbr.rel (0) target = $region29
  $region28: #{s3gen_flow_forward.3} parent=0 // pred_region
    _
  $region29: #{s3gen_flow_forward.3} parent=0 // pred_fallthru
    _
  // Predicated region
  $region30: #{s3gen_flow_forward.3} parent=0 // pred_check
    _
  $region31: #{s3gen_flow_forward.3} parent=0 // pred_check_branch
    %37 = sbr.rel (0) target = $region33
  $region32: #{s3gen_flow_forward.3} parent=0 // pred_region
    _
  $region33: #{s3gen_flow_forward.3} parent=0 // pred_fallthru
    _
  // Predicated region
  $region34: #{s3gen_flow_forward.3} parent=0 // pred_check
    _
  $region35: #{s3gen_flow_forward.3} parent=0 // pred_check_branch
    %39 = sbr.rel (0) target = $region37
  $region36: #{s3gen_flow_forward.3} parent=0 // pred_region
    _
  $region37: #{s3gen_flow_forward.3} parent=0 // pred_fallthru
    _
  // Predicated region
  $region38: #{s3gen_flow_forward.3} parent=0 // pred_check
    _
  $region39: #{s3gen_flow_forward.3} parent=0 // pred_check_branch
    %41 = sbr.rel (0) target = $region41
  $region40: #{s3gen_flow_forward.3} parent=0 // pred_region
    _
  $region41: #{s3gen_flow_forward.3} parent=0 // pred_fallthru
    _
  // Predicated region
  $region42: #{s3gen_flow_forward.3} parent=0 // pred_check
    _
  $region43: #{s3gen_flow_forward.3} parent=0 // pred_check_branch
    %43 = sbr.rel (0) target = $region45
  $region44: #{s3gen_flow_forward.3} parent=0 // pred_region
    _
  $region45: #{s3gen_flow_forward.3} parent=0 // pred_fallthru
    _
  // Predicated region
  $region46: #{s3gen_flow_forward.3} parent=0 // pred_check
    _
  $region47: #{s3gen_flow_forward.3} parent=0 // pred_check_branch
    %45 = sbr.rel (0) target = $region49
  $region48: #{s3gen_flow_forward.3} parent=0 // pred_region
    _
  $region49: #{s3gen_flow_forward.3} parent=0 // pred_fallthru
    _
  // Predicated region
  $region50: #{s3gen_flow_forward.3} parent=0 // pred_check
    _
  $region51: #{s3gen_flow_forward.3} parent=0 // pred_check_branch
    %47 = sbr.rel (0) target = $region53
  $region52: #{s3gen_flow_forward.3} parent=0 // pred_region
    _
  $region53: #{s3gen_flow_forward.3} parent=0 // pred_fallthru
    _
  // Predicated region
  $region54: #{s3gen_flow_forward.3} parent=0 // pred_check
    _
  $region55: #{s3gen_flow_forward.3} parent=0 // pred_check_branch
    %49 = sbr.rel (0) target = $region57
  $region56: #{s3gen_flow_forward.3} parent=0 // pred_region
    _
  $region57: #{s3gen_flow_forward.3} parent=0 // pred_fallthru
    _
  // Predicated region
  $region58: #{s3gen_flow_forward.3} parent=0 // pred_check
    _
  $region59: #{s3gen_flow_forward.3} parent=0 // pred_check_branch
    %51 = sbr.rel (0) target = $region61
  $region60: #{s3gen_flow_forward.3} parent=0 // pred_region
    _
  $region61: #{s3gen_flow_forward.3} parent=0 // pred_fallthru
    _
  // Predicated region
  $region62: #{s3gen_flow_forward.3} parent=0 // pred_check
    _
  $region63: #{s3gen_flow_forward.3} parent=0 // pred_check_branch
    %53 = sbr.rel (0) target = $region65
  $region64: #{s3gen_flow_forward.3} parent=0 // pred_region
    _
  $region65: #{s3gen_flow_forward.3} parent=0 // pred_fallthru
    _
  // Predicated region
  $region66: #{s3gen_flow_forward.3} parent=0 // pred_check
    _
  $region67: #{s3gen_flow_forward.3} parent=0 // pred_check_branch
    %55 = sbr.rel (0) target = $region69
  $region68: #{s3gen_flow_forward.3} parent=0 // pred_region
    _
  $region69: #{s3gen_flow_forward.3} parent=0 // pred_fallthru
    _
  %v57 = vld [vmem:[%s5] sm:$0xff]
  %v58 = vld [vmem:[%s5 + $0x8] sm:$0xff]
  %v59 = vld [vmem:[%s5 + $0x10] sm:$0xff]
  %v60 = vld [vmem:[%s5 + $0x18] sm:$0xff]
  %v61 = vld [vmem:[%s6] sm:$0xff]
  %v62 = vld [vmem:[%s6 + $0x8] sm:$0xff]
  %v63 = vld [vmem:[%s6 + $0x10] sm:$0xff]
  %v64 = vld [vmem:[%s6 + $0x18] sm:$0xff]
  %v65 = vld [vmem:[%s7] sm:$0xff]
  %v66 = vld [vmem:[%s7 + $0x8] sm:$0xff]
  %v67 = vld [vmem:[%s7 + $0x10] sm:$0xff]
  %v68 = vld [vmem:[%s7 + $0x18] sm:$0xff]
  %v69 = vld [vmem:[%s0] sm:$0xf]
  %v70 = vld [vmem:[%s0 + $0x4] sm:$0xf]
  %v71 = vld [vmem:[%s0 + $0x8] sm:$0xf]
  %v72 = vld [vmem:[%s0 + $0xc] sm:$0xf]
  %v73 = vld [vmem:[%s0 + $0x10] sm:$0xf]
  %v74 = vld [vmem:[%s0 + $0x14] sm:$0xf]
  %v75 = vld [vmem:[%s8] sm:$0xf]
  %v76 = vld [vmem:[%s8 + $0x4] sm:$0xf]
  %v77 = vld [vmem:[%s8 + $0x8] sm:$0xf]
  %v78 = vld [vmem:[%s8 + $0xc] sm:$0xf]
  %v79 = vld [vmem:[%s8 + $0x10] sm:$0xf]
  %v80 = vld [vmem:[%s8 + $0x14] sm:$0xf]
  %v81 = vld [vmem:[%s8 + $0x18] sm:$0xf]
  %v82 = vld [vmem:[%s8 + $0x1c] sm:$0xf]
  %v83 = vld [vmem:[%s8 + $0x20] sm:$0xf]
  %v84 = vld [vmem:[%s8 + $0x24] sm:$0xf]
  %v85 = vld [vmem:[%s8 + $0x28] sm:$0xf]
  %v86 = vld [vmem:[%s8 + $0x2c] sm:$0xf]
  %v87 = vld [vmem:[%s8 + $0x30] sm:$0xf]
  %v88 = vld [vmem:[%s8 + $0x34] sm:$0xf]
  %v89 = vld [vmem:[%s8 + $0x38] sm:$0xf]
  %v90 = vld [vmem:[%s8 + $0x3c] sm:$0xf]
  %v91 = vld [vmem:[%s9] sm:$0x1]
  %v93 = vlaneseq
  %v94 = vshrl.u32 %v93, 7
  %v95 = vsub.s32 0, %v94
  %v96 = vrot.slane %v91, %v95
  %v104 = vunpack.c.l.b16 %v69
  %v105 = vunpack.c.l.b16 %v70
  %v106 = vunpack.c.l.b16 %v71
  %v107 = vunpack.c.l.b16 %v72
  %v108 = vunpack.c.l.b16 %v73
  %v109 = vunpack.c.l.b16 %v74
  %v110 = vpack.c.b16 %v105, %v104
  %v111 = vpack.c.b16 %v107, %v106
  %v112 = vpack.c.b16 %v109, %v108
  %v132 = vunpack.c.l.b16 %v75
  %v133 = vunpack.c.l.b16 %v76
  %v134 = vunpack.c.l.b16 %v77
  %v135 = vunpack.c.l.b16 %v78
  %v136 = vunpack.c.l.b16 %v79
  %v137 = vunpack.c.l.b16 %v80
  %v138 = vunpack.c.l.b16 %v81
  %v139 = vunpack.c.l.b16 %v82
  %v140 = vunpack.c.l.b16 %v83
  %v141 = vunpack.c.l.b16 %v84
  %v142 = vunpack.c.l.b16 %v85
  %v143 = vunpack.c.l.b16 %v86
  %v144 = vunpack.c.l.b16 %v87
  %v145 = vunpack.c.l.b16 %v88
  %v146 = vunpack.c.l.b16 %v89
  %v147 = vunpack.c.l.b16 %v90
  %v148 = vpack.c.b16 %v133, %v132
  %v149 = vpack.c.b16 %v135, %v134
  %v150 = vpack.c.b16 %v137, %v136
  %v151 = vpack.c.b16 %v139, %v138
  %v152 = vpack.c.b16 %v141, %v140
  %v153 = vpack.c.b16 %v143, %v142
  %v154 = vpack.c.b16 %v145, %v144
  %v155 = vpack.c.b16 %v147, %v146
  %164 = vmatprep.subr.bf16.mxu0 0
  %165 = vmatpush1.bf16.msra.mxu0 %v155
  %166 = vmatprep.subr.bf16.mxu0 0
  %167 = vmatpush1.bf16.msra.mxu0 %v154
  %168 = vmatprep.subr.bf16.mxu0 0
  %169 = vmatpush1.bf16.msra.mxu0 %v153
  %170 = vmatprep.subr.bf16.mxu0 0
  %171 = vmatpush1.bf16.msra.mxu0 %v152
  %172 = vmatprep.subr.bf16.mxu0 0
  %173 = vmatpush1.bf16.msra.mxu0 %v151
  %174 = vmatprep.subr.bf16.mxu0 0
  %175 = vmatpush1.bf16.msra.mxu0 %v150
  %176 = vmatprep.subr.bf16.mxu0 0
  %177 = vmatpush1.bf16.msra.mxu0 %v149
  %178 = vmatprep.subr.bf16.mxu0 0
  %179 = vmatpush1.bf16.msra.mxu0 %v148
  %180 = vmatprep.subr.bf16.mxu0 0
  %181 = vmatpush2.bf16.msra.mxu0 0
  %182 = vmatprep.subr.bf16.mxu0 0
  %183 = vmatpush2.bf16.msra.mxu0 0
  %184 = vmatprep.subr.bf16.mxu0 0
  %185 = vmatpush2.bf16.msra.mxu0 0
  %186 = vmatprep.subr.bf16.mxu0 0
  %187 = vmatpush2.bf16.msra.mxu0 0
  %188 = vmatprep.subr.bf16.mxu0 0
  %189 = vmatpush2.bf16.msra.mxu0 0
  %190 = vmatprep.subr.bf16.mxu0 0
  %191 = vmatpush2.bf16.msra.mxu0 0
  %192 = vmatprep.subr.bf16.mxu0 0
  %193 = vmatpush2.bf16.msra.mxu0 0
  %194 = vmatprep.subr.bf16.mxu0 0
  %195 = vmatpush2.bf16.msra.mxu0 0
  %196 = vmatprep.mubr.bf16.mxu0 0
  %197 = vmatmul.mubr.bf16.gmra.mxu0 %v110
  %v198 = vpop.f32.mrf.mxu0
  %v199 = vadd.f32 %v96, %v198
  %v200 = vpop.f32.mrf.mxu0
  %v201 = vpop.f32.mrf.mxu0
  %v202 = vadd.f32 %v96, %v201
  %v203 = vpop.f32.mrf.mxu0
  %204 = vmatprep.mubr.bf16.mxu0 0
  %205 = vmatmul.mubr.bf16.gmra.mxu0 %v111
  %v206 = vpop.f32.mrf.mxu0
  %v207 = vadd.f32 %v96, %v206
  %v208 = vpop.f32.mrf.mxu0
  %v209 = vpop.f32.mrf.mxu0
  %v210 = vadd.f32 %v96, %v209
  %v211 = vpop.f32.mrf.mxu0
  %212 = vmatprep.mubr.bf16.mxu0 0
  %213 = vmatmul.mubr.bf16.gmra.mxu0 %v112
  %v214 = vpop.f32.mrf.mxu0
  %v215 = vadd.f32 %v96, %v214
  %v216 = vpop.f32.mrf.mxu0
  %v217 = vpop.f32.mrf.mxu0
  %v218 = vadd.f32 %v96, %v217
  %v219 = vpop.f32.mrf.mxu0
  %220 = vdwg.mxu0
  %v221 = vtanh.pop %v199
  %v222 = vtanh.pop %v202
  %v223 = vtanh.pop %v207
  %v224 = vtanh.pop %v210
  %v225 = vtanh.pop %v215
  %v226 = vtanh.pop %v218
  %v227 = vpack.c.bf16 %v222, %v221
  %v228 = vpack.c.bf16 %v224, %v223
  %v229 = vpack.c.bf16 %v226, %v225
  %v230 = vld [vmem:[%s10] sm:$0xf]
  %v231 = vld [vmem:[%s10 + $0x4] sm:$0xf]
  %v232 = vld [vmem:[%s10 + $0x8] sm:$0xf]
  %v233 = vld [vmem:[%s10 + $0xc] sm:$0xf]
  %v234 = vld [vmem:[%s10 + $0x10] sm:$0xf]
  %v235 = vld [vmem:[%s10 + $0x14] sm:$0xf]
  %v236 = vld [vmem:[%s10 + $0x18] sm:$0xf]
  %v237 = vld [vmem:[%s10 + $0x1c] sm:$0xf]
  %v238 = vld [vmem:[%s10 + $0x20] sm:$0xf]
  %v239 = vld [vmem:[%s10 + $0x24] sm:$0xf]
  %v240 = vld [vmem:[%s10 + $0x28] sm:$0xf]
  %v241 = vld [vmem:[%s10 + $0x2c] sm:$0xf]
  %v242 = vld [vmem:[%s10 + $0x30] sm:$0xf]
  %v243 = vld [vmem:[%s10 + $0x34] sm:$0xf]
  %v244 = vld [vmem:[%s10 + $0x38] sm:$0xf]
  %v245 = vld [vmem:[%s10 + $0x3c] sm:$0xf]
  %v246 = vld [vmem:[%s11] sm:$0x1]
  %v248 = vlaneseq
  %v249 = vshrl.u32 %v248, 7
  %v250 = vsub.s32 0, %v249
  %v251 = vrot.slane %v246, %v250
  %v269 = vunpack.c.l.b16 %v230
  %v270 = vunpack.c.l.b16 %v231
  %v271 = vunpack.c.l.b16 %v232
  %v272 = vunpack.c.l.b16 %v233
  %v273 = vunpack.c.l.b16 %v234
  %v274 = vunpack.c.l.b16 %v235
  %v275 = vunpack.c.l.b16 %v236
  %v276 = vunpack.c.l.b16 %v237
  %v277 = vunpack.c.l.b16 %v238
  %v278 = vunpack.c.l.b16 %v239
  %v279 = vunpack.c.l.b16 %v240
  %v280 = vunpack.c.l.b16 %v241
  %v281 = vunpack.c.l.b16 %v242
  %v282 = vunpack.c.l.b16 %v243
  %v283 = vunpack.c.l.b16 %v244
  %v284 = vunpack.c.l.b16 %v245
  %v285 = vpack.c.b16 %v270, %v269
  %v286 = vpack.c.b16 %v272, %v271
  %v287 = vpack.c.b16 %v274, %v273
  %v288 = vpack.c.b16 %v276, %v275
  %v289 = vpack.c.b16 %v278, %v277
  %v290 = vpack.c.b16 %v280, %v279
  %v291 = vpack.c.b16 %v282, %v281
  %v292 = vpack.c.b16 %v284, %v283
  %301 = vmatprep.subr.bf16.mxu0 0
  %302 = vmatpush1.bf16.msra.mxu0 %v292
  %303 = vmatprep.subr.bf16.mxu0 0
  %304 = vmatpush1.bf16.msra.mxu0 %v291
  %305 = vmatprep.subr.bf16.mxu0 0
  %306 = vmatpush1.bf16.msra.mxu0 %v290
  %307 = vmatprep.subr.bf16.mxu0 0
  %308 = vmatpush1.bf16.msra.mxu0 %v289
  %309 = vmatprep.subr.bf16.mxu0 0
  %310 = vmatpush1.bf16.msra.mxu0 %v288
  %311 = vmatprep.subr.bf16.mxu0 0
  %312 = vmatpush1.bf16.msra.mxu0 %v287
  %313 = vmatprep.subr.bf16.mxu0 0
  %314 = vmatpush1.bf16.msra.mxu0 %v286
  %315 = vmatprep.subr.bf16.mxu0 0
  %316 = vmatpush1.bf16.msra.mxu0 %v285
  %317 = vmatprep.subr.bf16.mxu0 0
  %318 = vmatpush2.bf16.msra.mxu0 0
  %319 = vmatprep.subr.bf16.mxu0 0
  %320 = vmatpush2.bf16.msra.mxu0 0
  %321 = vmatprep.subr.bf16.mxu0 0
  %322 = vmatpush2.bf16.msra.mxu0 0
  %323 = vmatprep.subr.bf16.mxu0 0
  %324 = vmatpush2.bf16.msra.mxu0 0
  %325 = vmatprep.subr.bf16.mxu0 0
  %326 = vmatpush2.bf16.msra.mxu0 0
  %327 = vmatprep.subr.bf16.mxu0 0
  %328 = vmatpush2.bf16.msra.mxu0 0
  %329 = vmatprep.subr.bf16.mxu0 0
  %330 = vmatpush2.bf16.msra.mxu0 0
  %331 = vmatprep.subr.bf16.mxu0 0
  %332 = vmatpush2.bf16.msra.mxu0 0
  %333 = vmatprep.mubr.bf16.mxu0 0
  %334 = vmatmul.mubr.bf16.gmra.mxu0 %v227
  %v335 = vpop.f32.mrf.mxu0
  %v336 = vpop.f32.mrf.mxu0
  %v337 = vpop.f32.mrf.mxu0
  %v338 = vadd.f32 %v251, %v337
  %v339 = vpop.f32.mrf.mxu0
  %340 = vmatprep.mubr.bf16.mxu0 0
  %341 = vmatmul.mubr.bf16.gmra.mxu0 %v228
  %v342 = vpop.f32.mrf.mxu0
  %v343 = vadd.f32 %v251, %v342
  %v344 = vpop.f32.mrf.mxu0
  %v345 = vpop.f32.mrf.mxu0
  %v346 = vpop.f32.mrf.mxu0
  %347 = vmatprep.mubr.bf16.mxu0 0
  %348 = vmatmul.mubr.bf16.gmra.mxu0 %v229
  %v349 = vpop.f32.mrf.mxu0
  %v350 = vadd.f32 %v251, %v349
  %v351 = vpop.f32.mrf.mxu0
  %v352 = vpop.f32.mrf.mxu0
  %v353 = vadd.f32 %v251, %v352
  %v354 = vpop.f32.mrf.mxu0
  %355 = vdwg.mxu0
  %v356 = vld [vmem:[%s1] sm:$0xff]
  %v357 = vld [vmem:[%s1 + $0x8] sm:$0xff]
  %v358 = vld [vmem:[%s1 + $0x10] sm:$0xff]
  %v359 = vld [vmem:[%s1 + $0x18] sm:$0xff]
  %v360 = vld [vmem:[%s3] sm:$0xff]
  %v361 = vld [vmem:[%s3 + $0x8] sm:$0xff]
  %v362 = vld [vmem:[%s3 + $0x10] sm:$0xff]
  %v363 = vld [vmem:[%s3 + $0x18] sm:$0xff]
  %v364 = vmul.f32 %v57, 0.999999
  %v365 = vmul.f32 %v58, 0.999999
  %v366 = vmul.f32 %v59, 0.999999
  %v367 = vmul.f32 %v60, 0.999999
  %v368 = vsub.f32 1.0, %v364
  %v369 = vsub.f32 1.0, %v365
  %v370 = vsub.f32 1.0, %v366
  %v371 = vsub.f32 1.0, %v367
  %373 = vset.pattern.permute.xlu0 0
  %374 = vperm.xlu0 %373, %v368
  %v375 = vpop.permute.xlu0 %374
  %378 = vset.pattern.permute.xlu0 0
  %379 = vperm.xlu0 %378, %v369
  %v380 = vpop.permute.xlu0 %379
  %383 = vset.pattern.permute.xlu0 0
  %384 = vperm.xlu0 %383, %v370
  %v385 = vpop.permute.xlu0 %384
  %388 = vset.pattern.permute.xlu0 0
  %389 = vperm.xlu0 %388, %v371
  %v390 = vpop.permute.xlu0 %389
  %v392 = vmul.f32 %v375, %v360
  %v393 = vmul.f32 %v380, %v361
  %v394 = vmul.f32 %v385, %v362
  %v395 = vmul.f32 %v390, %v363
  %397 = vset.pattern.permute.xlu0 0
  %398 = vperm.xlu0 %397, %v57
  %v399 = vpop.permute.xlu0 %398
  %402 = vset.pattern.permute.xlu0 0
  %403 = vperm.xlu0 %402, %v58
  %v404 = vpop.permute.xlu0 %403
  %407 = vset.pattern.permute.xlu0 0
  %408 = vperm.xlu0 %407, %v59
  %v409 = vpop.permute.xlu0 %408
  %412 = vset.pattern.permute.xlu0 0
  %413 = vperm.xlu0 %412, %v60
  %v414 = vpop.permute.xlu0 %413
  %v416 = vmul.f32 %v399, %v356
  %v417 = vmul.f32 %v404, %v357
  %v418 = vmul.f32 %v409, %v358
  %v419 = vmul.f32 %v414, %v359
  %v420 = vadd.f32 %v392, %v416
  %v421 = vadd.f32 %v393, %v417
  %v422 = vadd.f32 %v394, %v418
  %v423 = vadd.f32 %v395, %v419
  %v424 = vmul.f32 %v360, 0.999999
  %v425 = vmul.f32 %v361, 0.999999
  %v426 = vmul.f32 %v362, 0.999999
  %v427 = vmul.f32 %v363, 0.999999
  %v428 = vsub.f32 %v356, %v424
  %v429 = vsub.f32 %v357, %v425
  %v430 = vsub.f32 %v358, %v426
  %v431 = vsub.f32 %v359, %v427
  %v432 = vpack.c.bf16 %v421, %v420
  %v433 = vpack.c.bf16 %v423, %v422
  %v436 = vunpack.c.l.b16 %v432
  %v437 = vunpack.c.h.b16 %v432
  %v438 = vunpack.c.l.b16 %v433
  %v439 = vunpack.c.h.b16 %v433
  %v440 = vpack.c.b16 %v436, %v436
  %v441 = vpack.c.b16 %v437, %v437
  %v442 = vpack.c.b16 %v438, %v438
  %v443 = vpack.c.b16 %v439, %v439
  %448 = vst [vmem:[#allocation2] sm:$0xf] %v440
  %449 = vst [vmem:[#allocation2 + $0xc] sm:$0xf] %v441
  %450 = vst [vmem:[#allocation2 + $0x18] sm:$0xf] %v442
  %451 = vst [vmem:[#allocation2 + $0x24] sm:$0xf] %v443
  %v452 = vld [vmem:[%s2] sm:$0xff]
  %v453 = vld [vmem:[%s2 + $0x8] sm:$0xff]
  %v454 = vld [vmem:[%s2 + $0x10] sm:$0xff]
  %v455 = vld [vmem:[%s2 + $0x18] sm:$0xff]
  %457 = vset.pattern.permute.xlu0 0
  %458 = vperm.xlu0 %457, %v61
  %v459 = vpop.permute.xlu0 %458
  %462 = vset.pattern.permute.xlu0 0
  %463 = vperm.xlu0 %462, %v62
  %v464 = vpop.permute.xlu0 %463
  %467 = vset.pattern.permute.xlu0 0
  %468 = vperm.xlu0 %467, %v63
  %v469 = vpop.permute.xlu0 %468
  %472 = vset.pattern.permute.xlu0 0
  %473 = vperm.xlu0 %472, %v64
  %v474 = vpop.permute.xlu0 %473
  %v476 = vmul.f32 %v452, %v459
  %v477 = vmul.f32 %v453, %v464
  %v478 = vmul.f32 %v454, %v469
  %v479 = vmul.f32 %v455, %v474
  %v480 = vpack.c.bf16 %v477, %v476
  %v481 = vpack.c.bf16 %v479, %v478
  %v484 = vunpack.c.l.b16 %v480
  %v485 = vunpack.c.h.b16 %v480
  %v486 = vunpack.c.l.b16 %v481
  %v487 = vunpack.c.h.b16 %v481
  %v488 = vpack.c.b16 %v484, %v484
  %v489 = vpack.c.b16 %v485, %v485
  %v490 = vpack.c.b16 %v486, %v486
  %v491 = vpack.c.b16 %v487, %v487
  %496 = vst [vmem:[#allocation2 + $0x8] sm:$0xf] %v488
  %497 = vst [vmem:[#allocation2 + $0x14] sm:$0xf] %v489
  %498 = vst [vmem:[#allocation2 + $0x20] sm:$0xf] %v490
  %499 = vst [vmem:[#allocation2 + $0x2c] sm:$0xf] %v491
  %v500 = vmul.f32 %v338, %v459
  %v501 = vmul.f32 %v343, %v464
  %v502 = vpack.c.bf16 %v501, %v500
  %v504 = vunpack.c.l.b16 %v502
  %v505 = vunpack.c.h.b16 %v502
  %v506 = vpack.c.b16 %v504, %v504
  %v507 = vpack.c.b16 %v505, %v505
  %510 = vst [vmem:[#allocation2 + $0x4] sm:$0xf] %v506
  %511 = vst [vmem:[#allocation2 + $0x10] sm:$0xf] %v507
  %v512 = vmul.f32 %v350, %v469
  %v513 = vmul.f32 %v353, %v474
  %v514 = vpack.c.bf16 %v513, %v512
  %v516 = vunpack.c.l.b16 %v514
  %v517 = vunpack.c.h.b16 %v514
  %v518 = vpack.c.b16 %v516, %v516
  %v519 = vpack.c.b16 %v517, %v517
  %522 = vst [vmem:[#allocation2 + $0x1c] sm:$0xf] %v518
  %523 = vst [vmem:[#allocation2 + $0x28] sm:$0xf] %v519
  %v524 = vld [vmem:[%s4] sm:$0xff]
  %v525 = vld [vmem:[%s4 + $0x8] sm:$0xff]
  %v526 = vld [vmem:[%s4 + $0x10] sm:$0xff]
  %v527 = vld [vmem:[%s4 + $0x18] sm:$0xff]
  %v528 = vmul.f32 %v524, %v524
  %v529 = vmul.f32 %v525, %v525
  %v530 = vmul.f32 %v526, %v526
  %v531 = vmul.f32 %v527, %v527
  %vm532 = vcmask 261120
  %v533 = vsel %vm532, %v528, 0.0
  %534 = vadd.xlane.f32.xlu0 %v533
  %v535 = vpop.xlane.xlu0 %534
  %v536 = vsel %vm532, %v529, 0.0
  %537 = vadd.xlane.f32.xlu0 %v536
  %v538 = vpop.xlane.xlu0 %537
  %v539 = vsel %vm532, %v530, 0.0
  %540 = vadd.xlane.f32.xlu0 %v539
  %v541 = vpop.xlane.xlu0 %540
  %v542 = vsel %vm532, %v531, 0.0
  %543 = vadd.xlane.f32.xlu0 %v542
  %v544 = vpop.xlane.xlu0 %543
  %v545 = vmax.f32 %v535, 1e-24
  %v546 = vmax.f32 %v538, 1e-24
  %v547 = vmax.f32 %v541, 1e-24
  %v548 = vmax.f32 %v544, 1e-24
  %v549 = vrsqrt.pop %v545
  %v550 = vrsqrt.pop %v546
  %v551 = vrsqrt.pop %v547
  %v552 = vrsqrt.pop %v548
  %v553 = vmul.f32 %v524, %v549
  %v554 = vmul.f32 %v525, %v550
  %v555 = vmul.f32 %v526, %v551
  %v556 = vmul.f32 %v527, %v552
  %v557 = vpack.c.bf16 %v554, %v553
  %v558 = vpack.c.bf16 %v556, %v555
  %v559 = vld [vmem:[%s13] sm:$0xf]
  %v560 = vld [vmem:[%s13 + $0x4] sm:$0xf]
  %v561 = vld [vmem:[%s13 + $0x8] sm:$0xf]
  %v562 = vld [vmem:[%s13 + $0xc] sm:$0xf]
  %v563 = vld [vmem:[%s14] sm:$0x1]
  %v565 = vlaneseq
  %v566 = vshrl.u32 %v565, 7
  %v567 = vsub.s32 0, %v566
  %v568 = vrot.slane %v563, %v567
  %v574 = vunpack.c.l.b16 %v559
  %v575 = vunpack.c.l.b16 %v560
  %v576 = vunpack.c.l.b16 %v561
  %v577 = vunpack.c.l.b16 %v562
  %v578 = vpack.c.b16 %v575, %v574
  %v579 = vpack.c.b16 %v577, %v576
  %v583 = vsel %vm532, %v557, 0
  %v586 = vsel %vm532, %v558, 0
  %588 = vmatprep.subr.bf16.mxu0 0
  %589 = vmatpush1.bf16.msra.mxu0 0
  %590 = vmatprep.subr.bf16.mxu0 0
  %591 = vmatpush1.bf16.msra.mxu0 0
  %592 = vmatprep.subr.bf16.mxu0 0
  %593 = vmatpush1.bf16.msra.mxu0 0
  %594 = vmatprep.subr.bf16.mxu0 0
  %595 = vmatpush1.bf16.msra.mxu0 0
  %596 = vmatprep.subr.bf16.mxu0 0
  %597 = vmatpush1.bf16.msra.mxu0 0
  %598 = vmatprep.subr.bf16.mxu0 0
  %599 = vmatpush1.bf16.msra.mxu0 0
  %600 = vmatprep.subr.bf16.mxu0 0
  %601 = vmatpush1.bf16.msra.mxu0 %v579
  %602 = vmatprep.subr.bf16.mxu0 0
  %603 = vmatpush1.bf16.msra.mxu0 %v578
  %604 = vmatprep.subr.bf16.mxu0 0
  %605 = vmatpush2.bf16.msra.mxu0 0
  %606 = vmatprep.subr.bf16.mxu0 0
  %607 = vmatpush2.bf16.msra.mxu0 0
  %608 = vmatprep.subr.bf16.mxu0 0
  %609 = vmatpush2.bf16.msra.mxu0 0
  %610 = vmatprep.subr.bf16.mxu0 0
  %611 = vmatpush2.bf16.msra.mxu0 0
  %612 = vmatprep.subr.bf16.mxu0 0
  %613 = vmatpush2.bf16.msra.mxu0 0
  %614 = vmatprep.subr.bf16.mxu0 0
  %615 = vmatpush2.bf16.msra.mxu0 0
  %616 = vmatprep.subr.bf16.mxu0 0
  %617 = vmatpush2.bf16.msra.mxu0 0
  %618 = vmatprep.subr.bf16.mxu0 0
  %619 = vmatpush2.bf16.msra.mxu0 0
  %620 = vmatprep.mubr.bf16.mxu0 0
  %621 = vmatmul.mubr.bf16.gmra.mxu0 %v583
  %v622 = vpop.f32.mrf.mxu0
  %v623 = vadd.f32 %v568, %v622
  %v624 = vpop.f32.mrf.mxu0
  %v625 = vpop.f32.mrf.mxu0
  %v626 = vadd.f32 %v568, %v625
  %v627 = vpop.f32.mrf.mxu0
  %628 = vmatprep.mubr.bf16.mxu0 0
  %629 = vmatmul.mubr.bf16.gmra.mxu0 %v586
  %v630 = vpop.f32.mrf.mxu0
  %v631 = vadd.f32 %v568, %v630
  %v632 = vpop.f32.mrf.mxu0
  %v633 = vpop.f32.mrf.mxu0
  %v634 = vadd.f32 %v568, %v633
  %v635 = vpop.f32.mrf.mxu0
  %636 = vdwg.mxu0
  %v637 = vmul.f32 %v623, %v459
  %v638 = vmul.f32 %v626, %v464
  %v639 = vmul.f32 %v631, %v469
  %v640 = vmul.f32 %v634, %v474
  %v641 = vld [vmem:[%s15] sm:$0x1]
  %v643 = vlaneseq
  %v644 = vshrl.u32 %v643, 7
  %v645 = vsub.s32 0, %v644
  %v646 = vrot.slane %v641, %v645
  %v648 = vadd.f32 %v637, %v646
  %v649 = vadd.f32 %v638, %v646
  %v650 = vadd.f32 %v639, %v646
  %v651 = vadd.f32 %v640, %v646
  %v652 = vld [vmem:[%s16] sm:$0x1]
  %v654 = vlaneseq
  %v655 = vshrl.u32 %v654, 7
  %v656 = vsub.s32 0, %v655
  %v657 = vrot.slane %v652, %v656
  %v659 = vmul.f32 %v657, %v399
  %v660 = vmul.f32 %v657, %v404
  %v661 = vmul.f32 %v657, %v409
  %v662 = vmul.f32 %v657, %v414
  %v663 = vadd.f32 %v648, %v659
  %v664 = vadd.f32 %v649, %v660
  %v665 = vadd.f32 %v650, %v661
  %v666 = vadd.f32 %v651, %v662
  %v667 = vld [vmem:[#allocation2] sm:$0xff]
  %v668 = vld [vmem:[#allocation2 + $0x8] sm:$0xf]
  %v669 = vld [vmem:[#allocation2 + $0xc] sm:$0xff]
  %v670 = vld [vmem:[#allocation2 + $0x14] sm:$0xf]
  %v671 = vld [vmem:[#allocation2 + $0x18] sm:$0xff]
  %v672 = vld [vmem:[#allocation2 + $0x20] sm:$0xf]
  %v673 = vld [vmem:[#allocation2 + $0x24] sm:$0xff]
  %v674 = vld [vmem:[#allocation2 + $0x2c] sm:$0xf]
  %v675 = vld [vmem:[%s12] sm:$0xf]
  %v676 = vld [vmem:[%s12 + $0x4] sm:$0xf]
  %v677 = vld [vmem:[%s12 + $0x8] sm:$0xf]
  %v678 = vld [vmem:[%s12 + $0xc] sm:$0xf]
  %v679 = vld [vmem:[%s12 + $0x10] sm:$0xf]
  %v680 = vld [vmem:[%s12 + $0x14] sm:$0xf]
  %v681 = vld [vmem:[%s12 + $0x18] sm:$0xf]
  %v682 = vld [vmem:[%s12 + $0x1c] sm:$0xf]
  %v683 = vld [vmem:[%s12 + $0x20] sm:$0xf]
  %v684 = vld [vmem:[%s12 + $0x24] sm:$0xf]
  %v685 = vld [vmem:[%s12 + $0x28] sm:$0xf]
  %v686 = vld [vmem:[%s12 + $0x2c] sm:$0xf]
  %v687 = vld [vmem:[%s12 + $0x30] sm:$0xf]
  %v688 = vld [vmem:[%s12 + $0x34] sm:$0xf]
  %v689 = vld [vmem:[%s12 + $0x38] sm:$0xf]
  %v690 = vld [vmem:[%s12 + $0x3c] sm:$0xf]
  %v691 = vld [vmem:[%s12 + $0x40] sm:$0xf]
  %v692 = vld [vmem:[%s12 + $0x44] sm:$0xf]
  %v693 = vld [vmem:[%s12 + $0x48] sm:$0xf]
  %v694 = vld [vmem:[%s12 + $0x4c] sm:$0xf]
  %v695 = vld [vmem:[%s12 + $0x50] sm:$0xf]
  %v696 = vld [vmem:[%s12 + $0x54] sm:$0xf]
  %v697 = vld [vmem:[%s12 + $0x58] sm:$0xf]
  %v698 = vld [vmem:[%s12 + $0x5c] sm:$0xf]
  %v699 = vld [vmem:[%s12 + $0x60] sm:$0xf]
  %v700 = vld [vmem:[%s12 + $0x64] sm:$0xf]
  %v701 = vld [vmem:[%s12 + $0x68] sm:$0xf]
  %v702 = vld [vmem:[%s12 + $0x6c] sm:$0xf]
  %v703 = vld [vmem:[%s12 + $0x70] sm:$0xf]
  %v704 = vld [vmem:[%s12 + $0x74] sm:$0xf]
  %v705 = vld [vmem:[%s12 + $0x78] sm:$0xf]
  %v706 = vld [vmem:[%s12 + $0x7c] sm:$0xf]
  %v707 = vld [vmem:[%s12 + $0x80] sm:$0xf]
  %v708 = vld [vmem:[%s12 + $0x84] sm:$0xf]
  %v709 = vld [vmem:[%s12 + $0x88] sm:$0xf]
  %v710 = vld [vmem:[%s12 + $0x8c] sm:$0xf]
  %v711 = vld [vmem:[%s12 + $0x90] sm:$0xf]
  %v712 = vld [vmem:[%s12 + $0x94] sm:$0xf]
  %v713 = vld [vmem:[%s12 + $0x98] sm:$0xf]
  %v714 = vld [vmem:[%s12 + $0x9c] sm:$0xf]
  %v715 = vld [vmem:[%s12 + $0xa0] sm:$0xf]
  %v716 = vld [vmem:[%s12 + $0xa4] sm:$0xf]
  %v717 = vld [vmem:[%s12 + $0xa8] sm:$0xf]
  %v718 = vld [vmem:[%s12 + $0xac] sm:$0xf]
  %v719 = vld [vmem:[%s12 + $0xb0] sm:$0xf]
  %v720 = vld [vmem:[%s12 + $0xb4] sm:$0xf]
  %v721 = vld [vmem:[%s12 + $0xb8] sm:$0xf]
  %v722 = vld [vmem:[%s12 + $0xbc] sm:$0xf]
  %v731 = vunpack.c.l.b16 %v667
  %v732 = vunpack.c.h.b16 %v667
  %v733 = vunpack.c.l.b16 %v668
  %v734 = vunpack.c.l.b16 %v669
  %v735 = vunpack.c.h.b16 %v669
  %v736 = vunpack.c.l.b16 %v670
  %v737 = vunpack.c.l.b16 %v671
  %v738 = vunpack.c.h.b16 %v671
  %v739 = vunpack.c.l.b16 %v672
  %v740 = vunpack.c.l.b16 %v673
  %v741 = vunpack.c.h.b16 %v673
  %v742 = vunpack.c.l.b16 %v674
  %v743 = vpack.c.b16 %v734, %v731
  %v744 = vpack.c.b16 %v735, %v732
  %v745 = vpack.c.b16 %v736, %v733
  %v746 = vpack.c.b16 %v740, %v737
  %v747 = vpack.c.b16 %v741, %v738
  %v748 = vpack.c.b16 %v742, %v739
  %v803 = vunpack.c.l.b16 %v675
  %v804 = vunpack.c.l.b16 %v676
  %v805 = vunpack.c.l.b16 %v677
  %v806 = vunpack.c.l.b16 %v678
  %v807 = vunpack.c.l.b16 %v679
  %v808 = vunpack.c.l.b16 %v680
  %v809 = vunpack.c.l.b16 %v681
  %v810 = vunpack.c.l.b16 %v682
  %v811 = vunpack.c.l.b16 %v683
  %v812 = vunpack.c.l.b16 %v684
  %v813 = vunpack.c.l.b16 %v685
  %v814 = vunpack.c.l.b16 %v686
  %v815 = vunpack.c.l.b16 %v687
  %v816 = vunpack.c.l.b16 %v688
  %v817 = vunpack.c.l.b16 %v689
  %v818 = vunpack.c.l.b16 %v690
  %v819 = vunpack.c.l.b16 %v691
  %v820 = vunpack.c.l.b16 %v692
  %v821 = vunpack.c.l.b16 %v693
  %v822 = vunpack.c.l.b16 %v694
  %v823 = vunpack.c.l.b16 %v695
  %v824 = vunpack.c.l.b16 %v696
  %v825 = vunpack.c.l.b16 %v697
  %v826 = vunpack.c.l.b16 %v698
  %v827 = vunpack.c.l.b16 %v699
  %v828 = vunpack.c.l.b16 %v700
  %v829 = vunpack.c.l.b16 %v701
  %v830 = vunpack.c.l.b16 %v702
  %v831 = vunpack.c.l.b16 %v703
  %v832 = vunpack.c.l.b16 %v704
  %v833 = vunpack.c.l.b16 %v705
  %v834 = vunpack.c.l.b16 %v706
  %v835 = vunpack.c.l.b16 %v707
  %v836 = vunpack.c.l.b16 %v708
  %v837 = vunpack.c.l.b16 %v709
  %v838 = vunpack.c.l.b16 %v710
  %v839 = vunpack.c.l.b16 %v711
  %v840 = vunpack.c.l.b16 %v712
  %v841 = vunpack.c.l.b16 %v713
  %v842 = vunpack.c.l.b16 %v714
  %v843 = vunpack.c.l.b16 %v715
  %v844 = vunpack.c.l.b16 %v716
  %v845 = vunpack.c.l.b16 %v717
  %v846 = vunpack.c.l.b16 %v718
  %v847 = vunpack.c.l.b16 %v719
  %v848 = vunpack.c.l.b16 %v720
  %v849 = vunpack.c.l.b16 %v721
  %v850 = vunpack.c.l.b16 %v722
  %v851 = vpack.c.b16 %v804, %v803
  %v852 = vpack.c.b16 %v806, %v805
  %v853 = vpack.c.b16 %v808, %v807
  %v854 = vpack.c.b16 %v810, %v809
  %v855 = vpack.c.b16 %v812, %v811
  %v856 = vpack.c.b16 %v814, %v813
  %v857 = vpack.c.b16 %v816, %v815
  %v858 = vpack.c.b16 %v818, %v817
  %v859 = vpack.c.b16 %v820, %v819
  %v860 = vpack.c.b16 %v822, %v821
  %v861 = vpack.c.b16 %v824, %v823
  %v862 = vpack.c.b16 %v826, %v825
  %v863 = vpack.c.b16 %v828, %v827
  %v864 = vpack.c.b16 %v830, %v829
  %v865 = vpack.c.b16 %v832, %v831
  %v866 = vpack.c.b16 %v834, %v833
  %v867 = vpack.c.b16 %v836, %v835
  %v868 = vpack.c.b16 %v838, %v837
  %v869 = vpack.c.b16 %v840, %v839
  %v870 = vpack.c.b16 %v842, %v841
  %v871 = vpack.c.b16 %v844, %v843
  %v872 = vpack.c.b16 %v846, %v845
  %v873 = vpack.c.b16 %v848, %v847
  %v874 = vpack.c.b16 %v850, %v849
  %899 = vmatprep.subr.bf16.mxu0 0
  %900 = vmatpush1.bf16.msra.mxu0 %v858
  %901 = vmatprep.subr.bf16.mxu0 0
  %902 = vmatpush1.bf16.msra.mxu0 %v857
  %903 = vmatprep.subr.bf16.mxu0 0
  %904 = vmatpush1.bf16.msra.mxu0 %v856
  %905 = vmatprep.subr.bf16.mxu0 0
  %906 = vmatpush1.bf16.msra.mxu0 %v855
  %907 = vmatprep.subr.bf16.mxu0 0
  %908 = vmatpush1.bf16.msra.mxu0 %v854
  %909 = vmatprep.subr.bf16.mxu0 0
  %910 = vmatpush1.bf16.msra.mxu0 %v853
  %911 = vmatprep.subr.bf16.mxu0 0
  %912 = vmatpush1.bf16.msra.mxu0 %v852
  %913 = vmatprep.subr.bf16.mxu0 0
  %914 = vmatpush1.bf16.msra.mxu0 %v851
  %915 = vmatprep.subr.bf16.mxu0 0
  %916 = vmatpush2.bf16.msra.mxu0 %v866
  %917 = vmatprep.subr.bf16.mxu0 0
  %918 = vmatpush2.bf16.msra.mxu0 %v865
  %919 = vmatprep.subr.bf16.mxu0 0
  %920 = vmatpush2.bf16.msra.mxu0 %v864
  %921 = vmatprep.subr.bf16.mxu0 0
  %922 = vmatpush2.bf16.msra.mxu0 %v863
  %923 = vmatprep.subr.bf16.mxu0 0
  %924 = vmatpush2.bf16.msra.mxu0 %v862
  %925 = vmatprep.subr.bf16.mxu0 0
  %926 = vmatpush2.bf16.msra.mxu0 %v861
  %927 = vmatprep.subr.bf16.mxu0 0
  %928 = vmatpush2.bf16.msra.mxu0 %v860
  %929 = vmatprep.subr.bf16.mxu0 0
  %930 = vmatpush2.bf16.msra.mxu0 %v859
  %931 = vmatprep.mubr.bf16.mxu0 %v744
  %932 = vmatmul.mubr.bf16.gmra.mxu0 %v743
  %v933 = vpop.f32.mrf.mxu0
  %v934 = vadd.f32 %v663, %v933
  %v935 = vpop.f32.mrf.mxu0
  %v936 = vpop.f32.mrf.mxu0
  %v937 = vadd.f32 %v664, %v936
  %v938 = vpop.f32.mrf.mxu0
  %939 = vmatprep.mubr.bf16.mxu0 %v747
  %940 = vmatmul.mubr.bf16.gmra.mxu0 %v746
  %v941 = vpop.f32.mrf.mxu0
  %v942 = vadd.f32 %v665, %v941
  %v943 = vpop.f32.mrf.mxu0
  %v944 = vpop.f32.mrf.mxu0
  %v945 = vadd.f32 %v666, %v944
  %v946 = vpop.f32.mrf.mxu0
  %947 = vdwg.mxu0
  %948 = vmatprep.subr.bf16.mxu0 0
  %949 = vmatpush1.bf16.msra.mxu0 %v874
  %950 = vmatprep.subr.bf16.mxu0 0
  %951 = vmatpush1.bf16.msra.mxu0 %v873
  %952 = vmatprep.subr.bf16.mxu0 0
  %953 = vmatpush1.bf16.msra.mxu0 %v872
  %954 = vmatprep.subr.bf16.mxu0 0
  %955 = vmatpush1.bf16.msra.mxu0 %v871
  %956 = vmatprep.subr.bf16.mxu0 0
  %957 = vmatpush1.bf16.msra.mxu0 %v870
  %958 = vmatprep.subr.bf16.mxu0 0
  %959 = vmatpush1.bf16.msra.mxu0 %v869
  %960 = vmatprep.subr.bf16.mxu0 0
  %961 = vmatpush1.bf16.msra.mxu0 %v868
  %962 = vmatprep.subr.bf16.mxu0 0
  %963 = vmatpush1.bf16.msra.mxu0 %v867
  %964 = vmatprep.subr.bf16.mxu0 0
  %965 = vmatpush2.bf16.msra.mxu0 0
  %966 = vmatprep.subr.bf16.mxu0 0
  %967 = vmatpush2.bf16.msra.mxu0 0
  %968 = vmatprep.subr.bf16.mxu0 0
  %969 = vmatpush2.bf16.msra.mxu0 0
  %970 = vmatprep.subr.bf16.mxu0 0
  %971 = vmatpush2.bf16.msra.mxu0 0
  %972 = vmatprep.subr.bf16.mxu0 0
  %973 = vmatpush2.bf16.msra.mxu0 0
  %974 = vmatprep.subr.bf16.mxu0 0
  %975 = vmatpush2.bf16.msra.mxu0 0
  %976 = vmatprep.subr.bf16.mxu0 0
  %977 = vmatpush2.bf16.msra.mxu0 0
  %978 = vmatprep.subr.bf16.mxu0 0
  %979 = vmatpush2.bf16.msra.mxu0 0
  %980 = vmatprep.mubr.bf16.mxu0 0
  %981 = vmatmul.mubr.bf16.gmra.mxu0 %v745
  %v982 = vpop.f32.mrf.mxu0
  %v983 = vadd.f32 %v934, %v982
  %v984 = vpop.f32.mrf.mxu0
  %v985 = vpop.f32.mrf.mxu0
  %v986 = vadd.f32 %v937, %v985
  %v987 = vpop.f32.mrf.mxu0
  %988 = vmatprep.mubr.bf16.mxu0 0
  %989 = vmatmul.mubr.bf16.gmra.mxu0 %v748
  %v990 = vpop.f32.mrf.mxu0
  %v991 = vadd.f32 %v942, %v990
  %v992 = vpop.f32.mrf.mxu0
  %v993 = vpop.f32.mrf.mxu0
  %v994 = vadd.f32 %v945, %v993
  %v995 = vpop.f32.mrf.mxu0
  %996 = vdwg.mxu0
  %v997 = vsub.f32 %v983, %v428
  %v998 = vsub.f32 %v986, %v429
  %v999 = vsub.f32 %v991, %v430
  %v1000 = vsub.f32 %v994, %v431
  %1002 = vset.pattern.permute.xlu0 0
  %1003 = vperm.xlu0 %1002, %v65
  %v1004 = vpop.permute.xlu0 %1003
  %1007 = vset.pattern.permute.xlu0 0
  %1008 = vperm.xlu0 %1007, %v66
  %v1009 = vpop.permute.xlu0 %1008
  %1012 = vset.pattern.permute.xlu0 0
  %1013 = vperm.xlu0 %1012, %v67
  %v1014 = vpop.permute.xlu0 %1013
  %1017 = vset.pattern.permute.xlu0 0
  %1018 = vperm.xlu0 %1017, %v68
  %v1019 = vpop.permute.xlu0 %1018
  %v1021 = vmul.f32 %v997, %v1004
  %v1022 = vmul.f32 %v998, %v1009
  %v1023 = vmul.f32 %v999, %v1014
  %v1024 = vmul.f32 %v1000, %v1019
  %v1025 = vmul.f32 %v1021, %v1021
  %v1026 = vmul.f32 %v1022, %v1022
  %v1027 = vmul.f32 %v1023, %v1023
  %v1028 = vmul.f32 %v1024, %v1024
  %v1029 = vadd.f32 %v1025, %v1026
  %v1030 = vadd.f32 %v1029, %v1027
  %v1031 = vadd.f32 %v1030, %v1028
  %1032 = vadd.xlane.f32.xlu0 %v1031
  %v1033 = vpop.xlane.xlu0 %1032
  %v1034 = vrot.slane %v1033, 4
  %v1035 = vadd.f32 %v1033, %v1034
  %v1036 = vrot.slane %v1035, 2
  %v1037 = vadd.f32 %v1035, %v1036
  %v1038 = vrot.slane %v1037, 1
  %v1039 = vadd.f32 %v1037, %v1038
  %s1040 = vtos %v1039
  %vm1041 = vcmask 7168
  %v1042 = vsel %vm1041, %v65, 0.0
  %v1043 = vsel %vm1041, %v66, 0.0
  %v1044 = vadd.f32 %v1042, %v1043
  %v1045 = vsel %vm1041, %v67, 0.0
  %v1046 = vadd.f32 %v1044, %v1045
  %v1047 = vsel %vm1041, %v68, 0.0
  %v1048 = vadd.f32 %v1046, %v1047
  %1049 = vadd.xlane.f32.xlu0 %v1048
  %v1050 = vpop.xlane.xlu0 %1049
  %v1051 = vrot.slane %v1050, 4
  %v1052 = vadd.f32 %v1050, %v1051
  %v1053 = vrot.slane %v1052, 2
  %v1054 = vadd.f32 %v1052, %v1053
  %v1055 = vrot.slane %v1054, 1
  %v1056 = vadd.f32 %v1054, %v1055
  %s1057 = vtos %v1056
  %v1058 = vlaneseq
  %v1059 = vand.u32 %v1058, 127
  %vm1060 = vcmp.eq.s32.totalorder %v1059, 0
  %v1061 = vstv %s1040
  %v1062 = vsel %vm1060, %v1061, 0.0
  %vm1063 = vcmp.eq.s32.totalorder %v1059, 1
  %v1064 = vstv %s1057
  %v1065 = vsel %vm1063, %v1064, 0.0
  %v1066 = vadd.f32 %v1062, %v1065
  %1067 = vst [vmem:[%s17] sm:$0x1] %v1066
  // Predicated region
  $region70: #{s3gen_flow_forward.3} parent=0 // pred_check
    _
  $region71: #{s3gen_flow_forward.3} parent=0 // pred_check_branch
    %1069 = sbr.rel (0) target = $region73
  $region72: #{s3gen_flow_forward.3} parent=0 // pred_region
    _
  $region73: #{s3gen_flow_forward.3} parent=0 // pred_fallthru
    _
  // Predicated region
  $region74: #{s3gen_flow_forward.3} parent=0 // pred_check
    _
  $region75: #{s3gen_flow_forward.3} parent=0 // pred_check_branch
    %1071 = sbr.rel (0) target = $region77
  $region76: #{s3gen_flow_forward.3} parent=0 // pred_region
    _
  $region77: #{s3gen_flow_forward.3} parent=0 // pred_fallthru
    _

</llo_original>
